<compile_context>
chip_gen: v5e
topology: v5e:2x2
jax: 0.10.0
libtpu: 0.0.40
codegen_flags: <defaults>
</compile_context>

<pallas_src>
import functools
import math

import jax
import jax.numpy as jnp
from jax import lax
from jax.experimental import pallas as pl
from jax.experimental.pallas import tpu as pltpu


# ----------------------------- Pallas kernel ---------------------------------


def _shift_lanes(v, s):
    # out[:, l] = v[:, l + s], zero-filled at the ends of the (C, NL) slab; s is static.
    if s == 0:
        return v
    pad = jnp.zeros((v.shape[0], abs(s)), v.dtype)
    if s > 0:
        return jnp.concatenate([v[:, s:], pad], axis=1)
    return jnp.concatenate([pad, v[:, :s]], axis=1)


def _conv_taps(w_ref, v, taps, left):
    # sum_t w[t] @ v[:, j + t - left] -- per-tap accumulate (MXU), f32 accumulation.
    # Guard columns between batch blocks make the shifted reads correct without masks.
    acc = None
    for t in range(taps):
        term = jnp.dot(w_ref[t], _shift_lanes(v, t - left),
                       preferred_element_type=jnp.float32)
        acc = term if acc is None else acc + term
    return acc


def _make_kernel(Kt, K, pad_l, P):
    def kernel(z_ref, sk_ref, m_ref, wt_ref, w1a_ref, w1b_ref, w2_ref,
               bt_ref, b1_ref, b2_ref, o_ref):
        mask = m_ref[...]                                   # (1, NL) 0/1 valid-lane map
        # ---- ConvTranspose1d (stride 2): plain conv over the zero-upsampled x ----
        # (guard columns of y must be zero before conv1 reads them -> mask)
        y = (_conv_taps(wt_ref, z_ref[...], Kt, pad_l) + bt_ref[...]) * mask
        # ---- concat([y, skip], channels) + Conv1d 'same' + ReLU ----
        # concat removed by splitting conv1's weight into convT-half / skip-half.
        h = _conv_taps(w1a_ref, y, K, P) + _conv_taps(w1b_ref, sk_ref[...], K, P)
        h = jnp.maximum(h + b1_ref[...], 0.0) * mask
        # ---- Conv1d 'same' + ReLU ----
        o_ref[...] = jnp.maximum(_conv_taps(w2_ref, h, K, P) + b2_ref[...], 0.0)

    return kernel


# ------------------------------- wrapper --------------------------------------


def decoder_mini_block(x, x_skip, params, *, kernel_size=3, output_padding=0,
                       batch_tile=None):
    """Pallas implementation of DecoderMiniBlock.forward.

    x:      (N, filters_in, L)          float32
    x_skip: (N, filters_in // 2, L_out) float32
    returns (N, filters_in // 2, L_out) float32
    """
    wt, bt, w1, b1, w2, b2 = (params[k] for k in
                              ("wt", "bt", "w1", "b1", "w2", "b2"))
    N, C_in, L = x.shape
    C_half = C_in // 2
    K = kernel_size
    Kt = max(kernel_size, 3)
    stride = 2
    padding = (Kt - 3) // 2 + output_padding
    L_out = (L - 1) * stride - 2 * padding + Kt + output_padding
    pad_l = Kt - 1 - padding            # left reach of the convT window into the upsampled signal
    P = (K - 1) // 2                    # left reach of the 'same' convs
    assert 0 <= output_padding < stride
    assert x_skip.shape == (N, C_half, L_out), (x_skip.shape, (N, C_half, L_out))
    assert L_out >= (L - 1) * stride + 1     # upsampled values fit inside one block

    # ---- padded per-batch-block lane layout (guard zeros = conv 'same' padding) ----
    G = max(Kt - 1, K - 1)                   # guard width covers every conv's halo
    if batch_tile is None:
        batch_tile = 1
        for nb in range(1, N + 1):           # largest divisor whose tile stays <= 1024 lanes
            if N % nb:
                continue
            a = 128 // math.gcd(nb, 128)
            lp = -(-(L_out + G) // a) * a
            if nb * lp <= 1024:
                batch_tile = nb
    NB = batch_tile
    assert N % NB == 0
    lane_align = 128 // math.gcd(NB, 128)
    Lp = -(-(L_out + G) // lane_align) * lane_align   # per-block padded width
    NL = NB * Lp                                      # multiple of 128 -> lane-dense tiles
    num_tiles = N // NB

    f32 = jnp.float32
    # zero-upsampled x / skip / valid mask in the padded, lane-flat layout (layout plumbing only)
    z = jnp.zeros((N, C_in, Lp), f32).at[:, :, 0:2 * L:2].set(x.astype(f32))
    z_flat = jnp.transpose(z, (1, 0, 2)).reshape(C_in, N * Lp)
    sk = jnp.zeros((N, C_half, Lp), f32).at[:, :, :L_out].set(x_skip.astype(f32))
    sk_flat = jnp.transpose(sk, (1, 0, 2)).reshape(C_half, N * Lp)
    valid = jnp.zeros((1, Lp), f32).at[:, :L_out].set(1.0)
    valid_flat = jnp.tile(valid, (1, N))

    # ---- tap-major weights (taps, C_out, C_in); convT weight flipped to an ordinary conv ----
    wt_k = jnp.transpose(jnp.flip(wt, axis=-1), (2, 1, 0)).astype(f32)   # (Kt, C_half, C_in)
    w1_t = jnp.transpose(w1, (2, 0, 1)).astype(f32)                      # (K, C_half, C_in)
    w1a = w1_t[:, :, :C_half]                                            # acts on convT output
    w1b = w1_t[:, :, C_half:]                                            # acts on skip
    w2_t = jnp.transpose(w2, (2, 0, 1)).astype(f32)                      # (K, C_half, C_half)
    bt_c = bt.reshape(C_half, 1).astype(f32)
    b1_c = b1.reshape(C_half, 1).astype(f32)
    b2_c = b2.reshape(C_half, 1).astype(f32)

    kernel = _make_kernel(Kt, K, pad_l, P)

    out_flat = pl.pallas_call(
        kernel,
        out_shape=jax.ShapeDtypeStruct((C_half, N * Lp), f32),
        grid_spec=pltpu.PrefetchScalarGridSpec(
            num_scalar_prefetch=0,
            grid=(num_tiles,),
            in_specs=[
                pl.BlockSpec((C_in, NL), lambda i: (0, i)),
                pl.BlockSpec((C_half, NL), lambda i: (0, i)),
                pl.BlockSpec((1, NL), lambda i: (0, i)),
                pl.BlockSpec((Kt, C_half, C_in), lambda i: (0, 0, 0)),
                pl.BlockSpec((K, C_half, C_half), lambda i: (0, 0, 0)),
                pl.BlockSpec((K, C_half, C_half), lambda i: (0, 0, 0)),
                pl.BlockSpec((K, C_half, C_half), lambda i: (0, 0, 0)),
                pl.BlockSpec((C_half, 1), lambda i: (0, 0)),
                pl.BlockSpec((C_half, 1), lambda i: (0, 0)),
                pl.BlockSpec((C_half, 1), lambda i: (0, 0)),
            ],
            out_specs=pl.BlockSpec((C_half, NL), lambda i: (0, i)),
        ),
        compiler_params=pltpu.CompilerParams(
            dimension_semantics=("parallel",),
            # Tiny footprint; stays well inside v7x's 64 MiB physical VMEM.
            vmem_limit_bytes=32 * 1024 * 1024,
        ),
    )(z_flat, sk_flat, valid_flat, wt_k, w1a, w1b, w2_t, bt_c, b1_c, b2_c)

    return out_flat.reshape(C_half, N, Lp)[:, :, :L_out].transpose(1, 0, 2)


# --------------------------- pure-JAX reference --------------------------------


def decoder_mini_block_ref(x, x_skip, params, *, kernel_size=3, output_padding=0):
    wt, bt, w1, b1, w2, b2 = (params[k] for k in
                              ("wt", "bt", "w1", "b1", "w2", "b2"))
    Kt = max(kernel_size, 3)
    stride = 2
    padding = (Kt - 3) // 2 + output_padding
    dn = ("NCH", "OIH", "NCH")

    # ConvTranspose1d via lhs_dilation
    w_t = jnp.transpose(jnp.flip(wt, axis=-1), (1, 0, 2))  # (C_out, C_in, Kt)
    y = lax.conv_general_dilated(
        x, w_t, window_strides=(1,),
        padding=[(Kt - 1 - padding, Kt - 1 - padding + output_padding)],
        lhs_dilation=(stride,), dimension_numbers=dn)
    y = y + bt[None, :, None]

    cat = jnp.concatenate([y, x_skip], axis=1)

    K = kernel_size
    h = lax.conv_general_dilated(cat, w1, (1,), [((K - 1) // 2, K // 2)],
                                 dimension_numbers=dn) + b1[None, :, None]
    h = jnp.maximum(h, 0.0)
    o = lax.conv_general_dilated(h, w2, (1,), [((K - 1) // 2, K // 2)],
                                 dimension_numbers=dn) + b2[None, :, None]
    return jnp.maximum(o, 0.0)


# ----------------------------------- main --------------------------------------


if __name__ == "__main__":
    N = 2
    filters_in = 8
    L = 8
    kernel_size = 3

    C_half = filters_in // 2
    Kt = max(kernel_size, 3)

    key = jax.random.PRNGKey(0)
    ks = jax.random.split(key, 8)
    # Deterministic synthetic parameters (PyTorch layouts):
    #   convT1d.weight: (C_in, C_out, Kt); conv1d_*.weight: (C_out, C_in, K)
    params = {
        "wt": jax.random.normal(ks[0], (filters_in, C_half, Kt), jnp.float32) * 0.2,
        "bt": jax.random.normal(ks[1], (C_half,), jnp.float32) * 0.1,
        "w1": jax.random.normal(ks[2], (C_half, filters_in, kernel_size), jnp.float32) * 0.2,
        "b1": jax.random.normal(ks[3], (C_half,), jnp.float32) * 0.1,
        "w2": jax.random.normal(ks[4], (C_half, C_half, kernel_size), jnp.float32) * 0.2,
        "b2": jax.random.normal(ks[5], (C_half,), jnp.float32) * 0.1,
    }
    x = jax.random.normal(ks[6], (N, filters_in, L), jnp.float32)

    # (output_padding, batch_tile): the last config exercises the batch-tiled
    # (num_tiles=2) grid path that the padded 128-aligned layout makes legal.
    for output_padding, batch_tile in ((1, None), (0, None), (1, 1)):
        padding = (Kt - 3) // 2 + output_padding
        L_out = (L - 1) * 2 - 2 * padding + Kt + output_padding
        x_skip = jax.random.normal(jax.random.fold_in(ks[7], output_padding),
                                   (N, C_half, L_out), jnp.float32)

        fn = jax.jit(functools.partial(decoder_mini_block,
                                       kernel_size=kernel_size,
                                       output_padding=output_padding,
                                       batch_tile=batch_tile))
        out = jax.block_until_ready(fn(x, x_skip, params))

        ref = decoder_mini_block_ref(x, x_skip, params,
                                     kernel_size=kernel_size,
                                     output_padding=output_padding)
        assert out.shape == (N, C_half, L_out), out.shape
        err = float(jnp.max(jnp.abs(out - ref)))
        # f32 operands with f32 accumulation -> tight tolerance vs the f32 reference.
        assert jnp.allclose(out, ref, rtol=2e-2, atol=2e-2), err

    print("KERNEL_OK")
</pallas_src>

<mosaic_0001>
module attributes {stable_mosaic.version = 11 : i64} {
  func.func @kernel(%arg0: i32, %arg1: memref<8x128xf32, #tpu.memory_space<vmem>>, %arg2: memref<4x128xf32, #tpu.memory_space<vmem>>, %arg3: memref<1x128xf32, #tpu.memory_space<vmem>>, %arg4: memref<3x4x8xf32, #tpu.memory_space<vmem>>, %arg5: memref<3x4x4xf32, #tpu.memory_space<vmem>>, %arg6: memref<3x4x4xf32, #tpu.memory_space<vmem>>, %arg7: memref<3x4x4xf32, #tpu.memory_space<vmem>>, %arg8: memref<4x1xf32, #tpu.memory_space<vmem>>, %arg9: memref<4x1xf32, #tpu.memory_space<vmem>>, %arg10: memref<4x1xf32, #tpu.memory_space<vmem>>, %arg11: memref<4x128xf32, #tpu.memory_space<vmem>>) attributes {dimension_semantics = [#tpu.dimension_semantics<parallel>], iteration_bounds = array<i64: 1>, scalar_prefetch = 0 : i64, scratch_operands = 0 : i64, tpu.core_type = #tpu.core_type<tc>, window_params = [{transform_indices = @transform_0, window_bounds = array<i64: 8, 128>}, {transform_indices = @transform_1, window_bounds = array<i64: 4, 128>}, {transform_indices = @transform_2, window_bounds = array<i64: 1, 128>}, {pipeline_mode = #tpu.pipeline_mode<synchronous>, transform_indices = @transform_3, window_bounds = array<i64: 3, 4, 8>}, {pipeline_mode = #tpu.pipeline_mode<synchronous>, transform_indices = @transform_4, window_bounds = array<i64: 3, 4, 4>}, {pipeline_mode = #tpu.pipeline_mode<synchronous>, transform_indices = @transform_5, window_bounds = array<i64: 3, 4, 4>}, {pipeline_mode = #tpu.pipeline_mode<synchronous>, transform_indices = @transform_6, window_bounds = array<i64: 3, 4, 4>}, {pipeline_mode = #tpu.pipeline_mode<synchronous>, transform_indices = @transform_7, window_bounds = array<i64: 4, 1>}, {pipeline_mode = #tpu.pipeline_mode<synchronous>, transform_indices = @transform_8, window_bounds = array<i64: 4, 1>}, {pipeline_mode = #tpu.pipeline_mode<synchronous>, transform_indices = @transform_9, window_bounds = array<i64: 4, 1>}, {transform_indices = @transform_10, window_bounds = array<i64: 4, 128>}]} {
    %c0 = arith.constant 0 : index
    %c0_0 = arith.constant 0 : index
    %0 = vector.load %arg3[%c0, %c0_0] : memref<1x128xf32, #tpu.memory_space<vmem>>, vector<1x128xf32>
    %c0_1 = arith.constant 0 : index
    %c0_2 = arith.constant 0 : index
    %1 = vector.load %arg1[%c0_1, %c0_2] : memref<8x128xf32, #tpu.memory_space<vmem>>, vector<8x128xf32>
    %c0_3 = arith.constant 0 : index
    %c0_4 = arith.constant 0 : index
    %c0_5 = arith.constant 0 : index
    %2 = vector.load %arg4[%c0_3, %c0_4, %c0_5] : memref<3x4x8xf32, #tpu.memory_space<vmem>>, vector<1x4x8xf32>
    %3 = vector.shape_cast %2 : vector<1x4x8xf32> to vector<4x8xf32>
    %cst = arith.constant 0.000000e+00 : f32
    %4 = vector.broadcast %cst : f32 to vector<8x1xf32>
    %5 = vector.extract_strided_slice %1 {offsets = [0, 0], sizes = [8, 127], strides = [1, 1]} : vector<8x128xf32> to vector<8x127xf32>
    %6 = tpu.concatenate %4, %5 in 1 : vector<8x1xf32>, vector<8x127xf32> -> vector<8x128xf32>
    %cst_6 = arith.constant dense<0.000000e+00> : vector<4x128xf32>
    %7 = tpu.matmul %3, %6, %cst_6 {dimension_numbers = #tpu.dot_dimension_numbers<[1], [0], [0], [1], [0, 0, 1, 1], [], []>} : vector<4x8xf32>, vector<8x128xf32>, vector<4x128xf32> -> vector<4x128xf32>
    %c1 = arith.constant 1 : index
    %c0_7 = arith.constant 0 : index
    %c0_8 = arith.constant 0 : index
    %8 = vector.load %arg4[%c1, %c0_7, %c0_8] : memref<3x4x8xf32, #tpu.memory_space<vmem>>, vector<1x4x8xf32>
    %9 = vector.shape_cast %8 : vector<1x4x8xf32> to vector<4x8xf32>
    %cst_9 = arith.constant dense<0.000000e+00> : vector<4x128xf32>
    %10 = tpu.matmul %9, %1, %cst_9 {dimension_numbers = #tpu.dot_dimension_numbers<[1], [0], [0], [1], [0, 0, 1, 1], [], []>} : vector<4x8xf32>, vector<8x128xf32>, vector<4x128xf32> -> vector<4x128xf32>
    %11 = arith.addf %7, %10 : vector<4x128xf32>
    %c2 = arith.constant 2 : index
    %c0_10 = arith.constant 0 : index
    %c0_11 = arith.constant 0 : index
    %12 = vector.load %arg4[%c2, %c0_10, %c0_11] : memref<3x4x8xf32, #tpu.memory_space<vmem>>, vector<1x4x8xf32>
    %13 = vector.shape_cast %12 : vector<1x4x8xf32> to vector<4x8xf32>
    %cst_12 = arith.constant 0.000000e+00 : f32
    %14 = vector.broadcast %cst_12 : f32 to vector<8x1xf32>
    %15 = vector.extract_strided_slice %1 {offsets = [0, 1], sizes = [8, 127], strides = [1, 1]} : vector<8x128xf32> to vector<8x127xf32>
    %16 = tpu.concatenate %15, %14 in 1 : vector<8x127xf32>, vector<8x1xf32> -> vector<8x128xf32>
    %cst_13 = arith.constant dense<0.000000e+00> : vector<4x128xf32>
    %17 = tpu.matmul %13, %16, %cst_13 {dimension_numbers = #tpu.dot_dimension_numbers<[1], [0], [0], [1], [0, 0, 1, 1], [], []>} : vector<4x8xf32>, vector<8x128xf32>, vector<4x128xf32> -> vector<4x128xf32>
    %18 = arith.addf %11, %17 : vector<4x128xf32>
    %c0_14 = arith.constant 0 : index
    %c0_15 = arith.constant 0 : index
    %19 = vector.load %arg8[%c0_14, %c0_15] : memref<4x1xf32, #tpu.memory_space<vmem>>, vector<4x1xf32>
    %20 = vector.broadcast %19 : vector<4x1xf32> to vector<4x128xf32>
    %21 = arith.addf %18, %20 : vector<4x128xf32>
    %22 = vector.broadcast %0 : vector<1x128xf32> to vector<4x128xf32>
    %23 = arith.mulf %21, %22 : vector<4x128xf32>
    %c0_16 = arith.constant 0 : index
    %c0_17 = arith.constant 0 : index
    %c0_18 = arith.constant 0 : index
    %24 = vector.load %arg5[%c0_16, %c0_17, %c0_18] : memref<3x4x4xf32, #tpu.memory_space<vmem>>, vector<1x4x4xf32>
    %25 = vector.shape_cast %24 : vector<1x4x4xf32> to vector<4x4xf32>
    %cst_19 = arith.constant 0.000000e+00 : f32
    %26 = vector.broadcast %cst_19 : f32 to vector<4x1xf32>
    %27 = vector.extract_strided_slice %23 {offsets = [0, 0], sizes = [4, 127], strides = [1, 1]} : vector<4x128xf32> to vector<4x127xf32>
    %28 = tpu.concatenate %26, %27 in 1 : vector<4x1xf32>, vector<4x127xf32> -> vector<4x128xf32>
    %cst_20 = arith.constant dense<0.000000e+00> : vector<4x128xf32>
    %29 = tpu.matmul %25, %28, %cst_20 {dimension_numbers = #tpu.dot_dimension_numbers<[1], [0], [0], [1], [0, 0, 1, 1], [], []>} : vector<4x4xf32>, vector<4x128xf32>, vector<4x128xf32> -> vector<4x128xf32>
    %c1_21 = arith.constant 1 : index
    %c0_22 = arith.constant 0 : index
    %c0_23 = arith.constant 0 : index
    %30 = vector.load %arg5[%c1_21, %c0_22, %c0_23] : memref<3x4x4xf32, #tpu.memory_space<vmem>>, vector<1x4x4xf32>
    %31 = vector.shape_cast %30 : vector<1x4x4xf32> to vector<4x4xf32>
    %cst_24 = arith.constant dense<0.000000e+00> : vector<4x128xf32>
    %32 = tpu.matmul %31, %23, %cst_24 {dimension_numbers = #tpu.dot_dimension_numbers<[1], [0], [0], [1], [0, 0, 1, 1], [], []>} : vector<4x4xf32>, vector<4x128xf32>, vector<4x128xf32> -> vector<4x128xf32>
    %33 = arith.addf %29, %32 : vector<4x128xf32>
    %c2_25 = arith.constant 2 : index
    %c0_26 = arith.constant 0 : index
    %c0_27 = arith.constant 0 : index
    %34 = vector.load %arg5[%c2_25, %c0_26, %c0_27] : memref<3x4x4xf32, #tpu.memory_space<vmem>>, vector<1x4x4xf32>
    %35 = vector.shape_cast %34 : vector<1x4x4xf32> to vector<4x4xf32>
    %cst_28 = arith.constant 0.000000e+00 : f32
    %36 = vector.broadcast %cst_28 : f32 to vector<4x1xf32>
    %37 = vector.extract_strided_slice %23 {offsets = [0, 1], sizes = [4, 127], strides = [1, 1]} : vector<4x128xf32> to vector<4x127xf32>
    %38 = tpu.concatenate %37, %36 in 1 : vector<4x127xf32>, vector<4x1xf32> -> vector<4x128xf32>
    %cst_29 = arith.constant dense<0.000000e+00> : vector<4x128xf32>
    %39 = tpu.matmul %35, %38, %cst_29 {dimension_numbers = #tpu.dot_dimension_numbers<[1], [0], [0], [1], [0, 0, 1, 1], [], []>} : vector<4x4xf32>, vector<4x128xf32>, vector<4x128xf32> -> vector<4x128xf32>
    %40 = arith.addf %33, %39 : vector<4x128xf32>
    %c0_30 = arith.constant 0 : index
    %c0_31 = arith.constant 0 : index
    %41 = vector.load %arg2[%c0_30, %c0_31] : memref<4x128xf32, #tpu.memory_space<vmem>>, vector<4x128xf32>
    %c0_32 = arith.constant 0 : index
    %c0_33 = arith.constant 0 : index
    %c0_34 = arith.constant 0 : index
    %42 = vector.load %arg6[%c0_32, %c0_33, %c0_34] : memref<3x4x4xf32, #tpu.memory_space<vmem>>, vector<1x4x4xf32>
    %43 = vector.shape_cast %42 : vector<1x4x4xf32> to vector<4x4xf32>
    %cst_35 = arith.constant 0.000000e+00 : f32
    %44 = vector.broadcast %cst_35 : f32 to vector<4x1xf32>
    %45 = vector.extract_strided_slice %41 {offsets = [0, 0], sizes = [4, 127], strides = [1, 1]} : vector<4x128xf32> to vector<4x127xf32>
    %46 = tpu.concatenate %44, %45 in 1 : vector<4x1xf32>, vector<4x127xf32> -> vector<4x128xf32>
    %cst_36 = arith.constant dense<0.000000e+00> : vector<4x128xf32>
    %47 = tpu.matmul %43, %46, %cst_36 {dimension_numbers = #tpu.dot_dimension_numbers<[1], [0], [0], [1], [0, 0, 1, 1], [], []>} : vector<4x4xf32>, vector<4x128xf32>, vector<4x128xf32> -> vector<4x128xf32>
    %c1_37 = arith.constant 1 : index
    %c0_38 = arith.constant 0 : index
    %c0_39 = arith.constant 0 : index
    %48 = vector.load %arg6[%c1_37, %c0_38, %c0_39] : memref<3x4x4xf32, #tpu.memory_space<vmem>>, vector<1x4x4xf32>
    %49 = vector.shape_cast %48 : vector<1x4x4xf32> to vector<4x4xf32>
    %cst_40 = arith.constant dense<0.000000e+00> : vector<4x128xf32>
    %50 = tpu.matmul %49, %41, %cst_40 {dimension_numbers = #tpu.dot_dimension_numbers<[1], [0], [0], [1], [0, 0, 1, 1], [], []>} : vector<4x4xf32>, vector<4x128xf32>, vector<4x128xf32> -> vector<4x128xf32>
    %51 = arith.addf %47, %50 : vector<4x128xf32>
    %c2_41 = arith.constant 2 : index
    %c0_42 = arith.constant 0 : index
    %c0_43 = arith.constant 0 : index
    %52 = vector.load %arg6[%c2_41, %c0_42, %c0_43] : memref<3x4x4xf32, #tpu.memory_space<vmem>>, vector<1x4x4xf32>
    %53 = vector.shape_cast %52 : vector<1x4x4xf32> to vector<4x4xf32>
    %cst_44 = arith.constant 0.000000e+00 : f32
    %54 = vector.broadcast %cst_44 : f32 to vector<4x1xf32>
    %55 = vector.extract_strided_slice %41 {offsets = [0, 1], sizes = [4, 127], strides = [1, 1]} : vector<4x128xf32> to vector<4x127xf32>
    %56 = tpu.concatenate %55, %54 in 1 : vector<4x127xf32>, vector<4x1xf32> -> vector<4x128xf32>
    %cst_45 = arith.constant dense<0.000000e+00> : vector<4x128xf32>
    %57 = tpu.matmul %53, %56, %cst_45 {dimension_numbers = #tpu.dot_dimension_numbers<[1], [0], [0], [1], [0, 0, 1, 1], [], []>} : vector<4x4xf32>, vector<4x128xf32>, vector<4x128xf32> -> vector<4x128xf32>
    %58 = arith.addf %51, %57 : vector<4x128xf32>
    %59 = arith.addf %40, %58 : vector<4x128xf32>
    %c0_46 = arith.constant 0 : index
    %c0_47 = arith.constant 0 : index
    %60 = vector.load %arg9[%c0_46, %c0_47] : memref<4x1xf32, #tpu.memory_space<vmem>>, vector<4x1xf32>
    %61 = vector.broadcast %60 : vector<4x1xf32> to vector<4x128xf32>
    %62 = arith.addf %59, %61 : vector<4x128xf32>
    %cst_48 = arith.constant 0.000000e+00 : f32
    %63 = vector.broadcast %cst_48 : f32 to vector<4x128xf32>
    %64 = arith.maximumf %62, %63 : vector<4x128xf32>
    %65 = vector.broadcast %0 : vector<1x128xf32> to vector<4x128xf32>
    %66 = arith.mulf %64, %65 : vector<4x128xf32>
    %c0_49 = arith.constant 0 : index
    %c0_50 = arith.constant 0 : index
    %c0_51 = arith.constant 0 : index
    %67 = vector.load %arg7[%c0_49, %c0_50, %c0_51] : memref<3x4x4xf32, #tpu.memory_space<vmem>>, vector<1x4x4xf32>
    %68 = vector.shape_cast %67 : vector<1x4x4xf32> to vector<4x4xf32>
    %cst_52 = arith.constant 0.000000e+00 : f32
    %69 = vector.broadcast %cst_52 : f32 to vector<4x1xf32>
    %70 = vector.extract_strided_slice %66 {offsets = [0, 0], sizes = [4, 127], strides = [1, 1]} : vector<4x128xf32> to vector<4x127xf32>
    %71 = tpu.concatenate %69, %70 in 1 : vector<4x1xf32>, vector<4x127xf32> -> vector<4x128xf32>
    %cst_53 = arith.constant dense<0.000000e+00> : vector<4x128xf32>
    %72 = tpu.matmul %68, %71, %cst_53 {dimension_numbers = #tpu.dot_dimension_numbers<[1], [0], [0], [1], [0, 0, 1, 1], [], []>} : vector<4x4xf32>, vector<4x128xf32>, vector<4x128xf32> -> vector<4x128xf32>
    %c1_54 = arith.constant 1 : index
    %c0_55 = arith.constant 0 : index
    %c0_56 = arith.constant 0 : index
    %73 = vector.load %arg7[%c1_54, %c0_55, %c0_56] : memref<3x4x4xf32, #tpu.memory_space<vmem>>, vector<1x4x4xf32>
    %74 = vector.shape_cast %73 : vector<1x4x4xf32> to vector<4x4xf32>
    %cst_57 = arith.constant dense<0.000000e+00> : vector<4x128xf32>
    %75 = tpu.matmul %74, %66, %cst_57 {dimension_numbers = #tpu.dot_dimension_numbers<[1], [0], [0], [1], [0, 0, 1, 1], [], []>} : vector<4x4xf32>, vector<4x128xf32>, vector<4x128xf32> -> vector<4x128xf32>
    %76 = arith.addf %72, %75 : vector<4x128xf32>
    %c2_58 = arith.constant 2 : index
    %c0_59 = arith.constant 0 : index
    %c0_60 = arith.constant 0 : index
    %77 = vector.load %arg7[%c2_58, %c0_59, %c0_60] : memref<3x4x4xf32, #tpu.memory_space<vmem>>, vector<1x4x4xf32>
    %78 = vector.shape_cast %77 : vector<1x4x4xf32> to vector<4x4xf32>
    %cst_61 = arith.constant 0.000000e+00 : f32
    %79 = vector.broadcast %cst_61 : f32 to vector<4x1xf32>
    %80 = vector.extract_strided_slice %66 {offsets = [0, 1], sizes = [4, 127], strides = [1, 1]} : vector<4x128xf32> to vector<4x127xf32>
    %81 = tpu.concatenate %80, %79 in 1 : vector<4x127xf32>, vector<4x1xf32> -> vector<4x128xf32>
    %cst_62 = arith.constant dense<0.000000e+00> : vector<4x128xf32>
    %82 = tpu.matmul %78, %81, %cst_62 {dimension_numbers = #tpu.dot_dimension_numbers<[1], [0], [0], [1], [0, 0, 1, 1], [], []>} : vector<4x4xf32>, vector<4x128xf32>, vector<4x128xf32> -> vector<4x128xf32>
    %83 = arith.addf %76, %82 : vector<4x128xf32>
    %c0_63 = arith.constant 0 : index
    %c0_64 = arith.constant 0 : index
    %84 = vector.load %arg10[%c0_63, %c0_64] : memref<4x1xf32, #tpu.memory_space<vmem>>, vector<4x1xf32>
    %85 = vector.broadcast %84 : vector<4x1xf32> to vector<4x128xf32>
    %86 = arith.addf %83, %85 : vector<4x128xf32>
    %cst_65 = arith.constant 0.000000e+00 : f32
    %87 = vector.broadcast %cst_65 : f32 to vector<4x128xf32>
    %88 = arith.maximumf %86, %87 : vector<4x128xf32>
    %c0_66 = arith.constant 0 : index
    %c0_67 = arith.constant 0 : index
    %89 = vector.load %arg11[%c0_66, %c0_67] : memref<4x128xf32, #tpu.memory_space<vmem>>, vector<4x128xf32>
    tpu.vector_store %arg11[%c0_66, %c0_67], %88 {strides = array<i32>} : memref<4x128xf32, #tpu.memory_space<vmem>>, vector<4x128xf32>,
    return
  }
  func.func @transform_0(%arg0: i32) -> (i32, i32) {
    %c0_i32 = arith.constant 0 : i32
    %c0_i32_0 = arith.constant 0 : i32
    return %c0_i32, %arg0 : i32, i32
  }
  func.func @transform_1(%arg0: i32) -> (i32, i32) {
    %c0_i32 = arith.constant 0 : i32
    %c0_i32_0 = arith.constant 0 : i32
    return %c0_i32, %arg0 : i32, i32
  }
  func.func @transform_2(%arg0: i32) -> (i32, i32) {
    %c0_i32 = arith.constant 0 : i32
    %c0_i32_0 = arith.constant 0 : i32
    return %c0_i32, %arg0 : i32, i32
  }
  func.func @transform_3(%arg0: i32) -> (i32, i32, i32) {
    %c0_i32 = arith.constant 0 : i32
    %c0_i32_0 = arith.constant 0 : i32
    %c0_i32_1 = arith.constant 0 : i32
    %c0_i32_2 = arith.constant 0 : i32
    return %c0_i32, %c0_i32_0, %c0_i32_1 : i32, i32, i32
  }
  func.func @transform_4(%arg0: i32) -> (i32, i32, i32) {
    %c0_i32 = arith.constant 0 : i32
    %c0_i32_0 = arith.constant 0 : i32
    %c0_i32_1 = arith.constant 0 : i32
    %c0_i32_2 = arith.constant 0 : i32
    return %c0_i32, %c0_i32_0, %c0_i32_1 : i32, i32, i32
  }
  func.func @transform_5(%arg0: i32) -> (i32, i32, i32) {
    %c0_i32 = arith.constant 0 : i32
    %c0_i32_0 = arith.constant 0 : i32
    %c0_i32_1 = arith.constant 0 : i32
    %c0_i32_2 = arith.constant 0 : i32
    return %c0_i32, %c0_i32_0, %c0_i32_1 : i32, i32, i32
  }
  func.func @transform_6(%arg0: i32) -> (i32, i32, i32) {
    %c0_i32 = arith.constant 0 : i32
    %c0_i32_0 = arith.constant 0 : i32
    %c0_i32_1 = arith.constant 0 : i32
    %c0_i32_2 = arith.constant 0 : i32
    return %c0_i32, %c0_i32_0, %c0_i32_1 : i32, i32, i32
  }
  func.func @transform_7(%arg0: i32) -> (i32, i32) {
    %c0_i32 = arith.constant 0 : i32
    %c0_i32_0 = arith.constant 0 : i32
    %c0_i32_1 = arith.constant 0 : i32
    return %c0_i32, %c0_i32_0 : i32, i32
  }
  func.func @transform_8(%arg0: i32) -> (i32, i32) {
    %c0_i32 = arith.constant 0 : i32
    %c0_i32_0 = arith.constant 0 : i32
    %c0_i32_1 = arith.constant 0 : i32
    return %c0_i32, %c0_i32_0 : i32, i32
  }
  func.func @transform_9(%arg0: i32) -> (i32, i32) {
    %c0_i32 = arith.constant 0 : i32
    %c0_i32_0 = arith.constant 0 : i32
    %c0_i32_1 = arith.constant 0 : i32
    return %c0_i32, %c0_i32_0 : i32, i32
  }
  func.func @transform_10(%arg0: i32) -> (i32, i32) {
    %c0_i32 = arith.constant 0 : i32
    %c0_i32_0 = arith.constant 0 : i32
    return %c0_i32, %arg0 : i32, i32
  }
}

</mosaic_0001>

<llo_original>
// kernel: decoder_mini_block.1
$region0: #{decoder_mini_block.1}
  #allocation0 [shape = 'u32[]', space=smem, size = 0x4, offset = 0x4, fixed_abs, tag = 'smem constant byte address 0x4 - core index']
  #allocation1 [shape = 'u32[72,128]{1,0:T(1,128)}', space=vmem, size = 0x9000, scoped, tag = 'internal scratch']
  %s0 = inlined_call_operand.vmem [shape: f32[8,128], index: 0, kind: input, shape index: {}]
  %s1 = inlined_call_operand.vmem [shape: f32[4,128], index: 1, kind: input, shape index: {}]
  %s2 = inlined_call_operand.vmem [shape: f32[1,128], index: 2, kind: input, shape index: {}]
  %s3 = inlined_call_operand.vmem [shape: f32[3,4,8], index: 3, kind: input, shape index: {}]
  %s4 = inlined_call_operand.vmem [shape: f32[3,4,4], index: 4, kind: input, shape index: {}]
  %s5 = inlined_call_operand.vmem [shape: f32[3,4,4], index: 5, kind: input, shape index: {}]
  %s6 = inlined_call_operand.vmem [shape: f32[3,4,4], index: 6, kind: input, shape index: {}]
  %s7 = inlined_call_operand.vmem [shape: f32[4,1], index: 7, kind: input, shape index: {}]
  %s8 = inlined_call_operand.vmem [shape: f32[4,1], index: 8, kind: input, shape index: {}]
  %s9 = inlined_call_operand.vmem [shape: f32[4,1], index: 9, kind: input, shape index: {}]
  %s10 = inlined_call_operand.vmem [shape: f32[4,128], index: 10, kind: output, shape index: {}]
  %s11 = sld [smem:[#allocation0]]
  $region50: #{decoder_mini_block.1} parent=0
    _
  %s13 = ssub.s32 1, %s11
  %s14 = scalar_select 0, %s13, %s11
  // Predicated region
  $region2: #{decoder_mini_block.1} parent=0 // pred_check
    _
  $region3: #{decoder_mini_block.1} parent=0 // pred_check_branch
    %16 = sbr.rel (0) target = $region5
  $region4: #{decoder_mini_block.1} parent=0 // pred_region
    _
  $region5: #{decoder_mini_block.1} parent=0 // pred_fallthru
    _
  // Predicated region
  $region6: #{decoder_mini_block.1} parent=0 // pred_check
    _
  $region7: #{decoder_mini_block.1} parent=0 // pred_check_branch
    %18 = sbr.rel (0) target = $region9
  $region8: #{decoder_mini_block.1} parent=0 // pred_region
    _
  $region9: #{decoder_mini_block.1} parent=0 // pred_fallthru
    _
  // Predicated region
  $region10: #{decoder_mini_block.1} parent=0 // pred_check
    _
  $region11: #{decoder_mini_block.1} parent=0 // pred_check_branch
    %20 = sbr.rel (0) target = $region13
  $region12: #{decoder_mini_block.1} parent=0 // pred_region
    _
  $region13: #{decoder_mini_block.1} parent=0 // pred_fallthru
    _
  // Predicated region
  $region14: #{decoder_mini_block.1} parent=0 // pred_check
    _
  $region15: #{decoder_mini_block.1} parent=0 // pred_check_branch
    %22 = sbr.rel (0) target = $region17
  $region16: #{decoder_mini_block.1} parent=0 // pred_region
    _
  $region17: #{decoder_mini_block.1} parent=0 // pred_fallthru
    _
  // Predicated region
  $region18: #{decoder_mini_block.1} parent=0 // pred_check
    _
  $region19: #{decoder_mini_block.1} parent=0 // pred_check_branch
    %24 = sbr.rel (0) target = $region21
  $region20: #{decoder_mini_block.1} parent=0 // pred_region
    _
  $region21: #{decoder_mini_block.1} parent=0 // pred_fallthru
    _
  // Predicated region
  $region22: #{decoder_mini_block.1} parent=0 // pred_check
    _
  $region23: #{decoder_mini_block.1} parent=0 // pred_check_branch
    %26 = sbr.rel (0) target = $region25
  $region24: #{decoder_mini_block.1} parent=0 // pred_region
    _
  $region25: #{decoder_mini_block.1} parent=0 // pred_fallthru
    _
  // Predicated region
  $region26: #{decoder_mini_block.1} parent=0 // pred_check
    _
  $region27: #{decoder_mini_block.1} parent=0 // pred_check_branch
    %28 = sbr.rel (0) target = $region29
  $region28: #{decoder_mini_block.1} parent=0 // pred_region
    _
  $region29: #{decoder_mini_block.1} parent=0 // pred_fallthru
    _
  // Predicated region
  $region30: #{decoder_mini_block.1} parent=0 // pred_check
    _
  $region31: #{decoder_mini_block.1} parent=0 // pred_check_branch
    %30 = sbr.rel (0) target = $region33
  $region32: #{decoder_mini_block.1} parent=0 // pred_region
    _
  $region33: #{decoder_mini_block.1} parent=0 // pred_fallthru
    _
  // Predicated region
  $region34: #{decoder_mini_block.1} parent=0 // pred_check
    _
  $region35: #{decoder_mini_block.1} parent=0 // pred_check_branch
    %32 = sbr.rel (0) target = $region37
  $region36: #{decoder_mini_block.1} parent=0 // pred_region
    _
  $region37: #{decoder_mini_block.1} parent=0 // pred_fallthru
    _
  // Predicated region
  $region38: #{decoder_mini_block.1} parent=0 // pred_check
    _
  $region39: #{decoder_mini_block.1} parent=0 // pred_check_branch
    %34 = sbr.rel (0) target = $region41
  $region40: #{decoder_mini_block.1} parent=0 // pred_region
    _
  $region41: #{decoder_mini_block.1} parent=0 // pred_fallthru
    _
  %v35 = vld [vmem:[%s2] sm:$0x1]
  %v36 = vld [vmem:[%s0] sm:$0xff]
  %v37 = vld [vmem:[%s3] sm:$0xf]
  %39 = vrot.lane.b32.xlu0 %v36, 1
  %v40 = vpop.permute.xlu0 %39
  %vm42 = vcmask 7168
  %v43 = vsel %vm42, 0.0, %v40
  %s44 = scalar_lea.vmem %s3, 4
  %v45 = vld [vmem:[%s44] sm:$0xf]
  %vm46 = vcmask 64512
  %v48 = vsel %vm46, %v45, 0
  %50 = vmatpush.msra.mxu0 0.0
  %51 = vmatpush.msra.mxu0 0.0
  %52 = vmatpush.msra.mxu0 0.0
  %53 = vmatpush.msra.mxu0 0.0
  %54 = vmatpush.msra.mxu0 0.0
  %55 = vmatpush.msra.mxu0 0.0
  %56 = vmatpush.msra.mxu0 0.0
  %57 = vmatpush.msra.mxu0 0.0
  %58 = vmatpush.msra.mxu0 0.0
  %59 = vmatpush.msra.mxu0 0.0
  %60 = vmatpush.msra.mxu0 0.0
  %61 = vmatpush.msra.mxu0 0.0
  %62 = vmatpush.msra.mxu0 0.0
  %63 = vmatpush.msra.mxu0 0.0
  %64 = vmatpush.msra.mxu0 0.0
  %65 = vmatpush.msra.mxu0 %v36
  %66 = vmatmul.f32.gmra.mxu0 %v48
  %v67 = vpop.f32.mrf.mxu0
  %v68 = vadd.f32 0.0, %v67
  %69 = vdwg.mxu0
  %v71 = vsel %vm46, %v37, 0
  %73 = vmatpush.msra.mxu0 0.0
  %74 = vmatpush.msra.mxu0 0.0
  %75 = vmatpush.msra.mxu0 0.0
  %76 = vmatpush.msra.mxu0 0.0
  %77 = vmatpush.msra.mxu0 0.0
  %78 = vmatpush.msra.mxu0 0.0
  %79 = vmatpush.msra.mxu0 0.0
  %80 = vmatpush.msra.mxu0 0.0
  %81 = vmatpush.msra.mxu0 0.0
  %82 = vmatpush.msra.mxu0 0.0
  %83 = vmatpush.msra.mxu0 0.0
  %84 = vmatpush.msra.mxu0 0.0
  %85 = vmatpush.msra.mxu0 0.0
  %86 = vmatpush.msra.mxu0 0.0
  %87 = vmatpush.msra.mxu0 0.0
  %88 = vmatpush.msra.mxu0 %v43
  %89 = vmatmul.f32.gmra.mxu0 %v71
  %v90 = vpop.f32.mrf.mxu0
  %v91 = vadd.f32 %v68, %v90
  %92 = vdwg.mxu0
  %s93 = scalar_lea.vmem %s3, 8
  %v94 = vld [vmem:[%s93] sm:$0xf]
  %95 = vrot.lane.b32.xlu0 %v36, 127
  %v96 = vpop.permute.xlu0 %95
  %vm98 = vcmask 1039360
  %v99 = vsel %vm98, %v96, 0.0
  %v101 = vsel %vm46, %v94, 0
  %103 = vmatpush.msra.mxu0 0.0
  %104 = vmatpush.msra.mxu0 0.0
  %105 = vmatpush.msra.mxu0 0.0
  %106 = vmatpush.msra.mxu0 0.0
  %107 = vmatpush.msra.mxu0 0.0
  %108 = vmatpush.msra.mxu0 0.0
  %109 = vmatpush.msra.mxu0 0.0
  %110 = vmatpush.msra.mxu0 0.0
  %111 = vmatpush.msra.mxu0 0.0
  %112 = vmatpush.msra.mxu0 0.0
  %113 = vmatpush.msra.mxu0 0.0
  %114 = vmatpush.msra.mxu0 0.0
  %115 = vmatpush.msra.mxu0 0.0
  %116 = vmatpush.msra.mxu0 0.0
  %117 = vmatpush.msra.mxu0 0.0
  %118 = vmatpush.msra.mxu0 %v99
  %119 = vmatmul.f32.gmra.mxu0 %v101
  %v120 = vpop.f32.mrf.mxu0
  %v121 = vadd.f32 0.0, %v120
  %122 = vdwg.mxu0
  %v123 = vadd.f32 %v91, %v121
  %v124 = vld [vmem:[%s7] sm:$0xf]
  %126 = vset.pattern.permute.xlu0 0
  %127 = vperm.xlu0 %126, %v124
  %v128 = vpop.permute.xlu0 %127
  %v130 = vadd.f32 %v123, %v128
  %v132 = vperm.slane %v35, 0
  %v134 = vmul.f32 %v130, %v132
  %v135 = vld [vmem:[%s4] sm:$0xf]
  %137 = vrot.lane.b32.xlu0 %v134, 1
  %v138 = vpop.permute.xlu0 %137
  %v140 = vsel %vm42, 0.0, %v138
  %s141 = scalar_lea.vmem %s4, 4
  %v142 = vld [vmem:[%s141] sm:$0xf]
  %vm143 = vcmask 31744
  %v145 = vsel %vm143, %v142, 0
  %vm147 = vcmask 1043456
  %v148 = vsel %vm147, %v134, 0
  %150 = vmatpush.msra.mxu0 0.0
  %151 = vmatpush.msra.mxu0 0.0
  %152 = vmatpush.msra.mxu0 0.0
  %153 = vmatpush.msra.mxu0 0.0
  %154 = vmatpush.msra.mxu0 0.0
  %155 = vmatpush.msra.mxu0 0.0
  %156 = vmatpush.msra.mxu0 0.0
  %157 = vmatpush.msra.mxu0 0.0
  %158 = vmatpush.msra.mxu0 0.0
  %159 = vmatpush.msra.mxu0 0.0
  %160 = vmatpush.msra.mxu0 0.0
  %161 = vmatpush.msra.mxu0 0.0
  %162 = vmatpush.msra.mxu0 0.0
  %163 = vmatpush.msra.mxu0 0.0
  %164 = vmatpush.msra.mxu0 0.0
  %165 = vmatpush.msra.mxu0 %v148
  %166 = vmatmul.f32.gmra.mxu0 %v145
  %v167 = vpop.f32.mrf.mxu0
  %v168 = vadd.f32 0.0, %v167
  %169 = vdwg.mxu0
  %v171 = vsel %vm143, %v135, 0
  %v174 = vsel %vm147, %v140, 0
  %176 = vmatpush.msra.mxu0 0.0
  %177 = vmatpush.msra.mxu0 0.0
  %178 = vmatpush.msra.mxu0 0.0
  %179 = vmatpush.msra.mxu0 0.0
  %180 = vmatpush.msra.mxu0 0.0
  %181 = vmatpush.msra.mxu0 0.0
  %182 = vmatpush.msra.mxu0 0.0
  %183 = vmatpush.msra.mxu0 0.0
  %184 = vmatpush.msra.mxu0 0.0
  %185 = vmatpush.msra.mxu0 0.0
  %186 = vmatpush.msra.mxu0 0.0
  %187 = vmatpush.msra.mxu0 0.0
  %188 = vmatpush.msra.mxu0 0.0
  %189 = vmatpush.msra.mxu0 0.0
  %190 = vmatpush.msra.mxu0 0.0
  %191 = vmatpush.msra.mxu0 %v174
  %192 = vmatmul.f32.gmra.mxu0 %v171
  %v193 = vpop.f32.mrf.mxu0
  %v194 = vadd.f32 %v168, %v193
  %195 = vdwg.mxu0
  %s196 = scalar_lea.vmem %s4, 8
  %v197 = vld [vmem:[%s196] sm:$0xf]
  %198 = vrot.lane.b32.xlu0 %v134, 127
  %v199 = vpop.permute.xlu0 %198
  %v201 = vsel %vm98, %v199, 0.0
  %v203 = vsel %vm143, %v197, 0
  %v206 = vsel %vm147, %v201, 0
  %208 = vmatpush.msra.mxu0 0.0
  %209 = vmatpush.msra.mxu0 0.0
  %210 = vmatpush.msra.mxu0 0.0
  %211 = vmatpush.msra.mxu0 0.0
  %212 = vmatpush.msra.mxu0 0.0
  %213 = vmatpush.msra.mxu0 0.0
  %214 = vmatpush.msra.mxu0 0.0
  %215 = vmatpush.msra.mxu0 0.0
  %216 = vmatpush.msra.mxu0 0.0
  %217 = vmatpush.msra.mxu0 0.0
  %218 = vmatpush.msra.mxu0 0.0
  %219 = vmatpush.msra.mxu0 0.0
  %220 = vmatpush.msra.mxu0 0.0
  %221 = vmatpush.msra.mxu0 0.0
  %222 = vmatpush.msra.mxu0 0.0
  %223 = vmatpush.msra.mxu0 %v206
  %224 = vmatmul.f32.gmra.mxu0 %v203
  %v225 = vpop.f32.mrf.mxu0
  %v226 = vadd.f32 0.0, %v225
  %227 = vdwg.mxu0
  %v228 = vadd.f32 %v194, %v226
  %v229 = vld [vmem:[%s1] sm:$0xf]
  %v230 = vld [vmem:[%s5] sm:$0xf]
  %232 = vrot.lane.b32.xlu0 %v229, 1
  %v233 = vpop.permute.xlu0 %232
  %v235 = vsel %vm42, 0.0, %v233
  %s236 = scalar_lea.vmem %s5, 4
  %v237 = vld [vmem:[%s236] sm:$0xf]
  %v239 = vsel %vm143, %v237, 0
  %v241 = vsel %vm147, %v229, 0
  %243 = vmatpush.msra.mxu0 0.0
  %244 = vmatpush.msra.mxu0 0.0
  %245 = vmatpush.msra.mxu0 0.0
  %246 = vmatpush.msra.mxu0 0.0
  %247 = vmatpush.msra.mxu0 0.0
  %248 = vmatpush.msra.mxu0 0.0
  %249 = vmatpush.msra.mxu0 0.0
  %250 = vmatpush.msra.mxu0 0.0
  %251 = vmatpush.msra.mxu0 0.0
  %252 = vmatpush.msra.mxu0 0.0
  %253 = vmatpush.msra.mxu0 0.0
  %254 = vmatpush.msra.mxu0 0.0
  %255 = vmatpush.msra.mxu0 0.0
  %256 = vmatpush.msra.mxu0 0.0
  %257 = vmatpush.msra.mxu0 0.0
  %258 = vmatpush.msra.mxu0 %v241
  %259 = vmatmul.f32.gmra.mxu0 %v239
  %v260 = vpop.f32.mrf.mxu0
  %v261 = vadd.f32 0.0, %v260
  %262 = vdwg.mxu0
  %v264 = vsel %vm143, %v230, 0
  %v267 = vsel %vm147, %v235, 0
  %269 = vmatpush.msra.mxu0 0.0
  %270 = vmatpush.msra.mxu0 0.0
  %271 = vmatpush.msra.mxu0 0.0
  %272 = vmatpush.msra.mxu0 0.0
  %273 = vmatpush.msra.mxu0 0.0
  %274 = vmatpush.msra.mxu0 0.0
  %275 = vmatpush.msra.mxu0 0.0
  %276 = vmatpush.msra.mxu0 0.0
  %277 = vmatpush.msra.mxu0 0.0
  %278 = vmatpush.msra.mxu0 0.0
  %279 = vmatpush.msra.mxu0 0.0
  %280 = vmatpush.msra.mxu0 0.0
  %281 = vmatpush.msra.mxu0 0.0
  %282 = vmatpush.msra.mxu0 0.0
  %283 = vmatpush.msra.mxu0 0.0
  %284 = vmatpush.msra.mxu0 %v267
  %285 = vmatmul.f32.gmra.mxu0 %v264
  %v286 = vpop.f32.mrf.mxu0
  %v287 = vadd.f32 %v261, %v286
  %288 = vdwg.mxu0
  %s289 = scalar_lea.vmem %s5, 8
  %v290 = vld [vmem:[%s289] sm:$0xf]
  %291 = vrot.lane.b32.xlu0 %v229, 127
  %v292 = vpop.permute.xlu0 %291
  %v294 = vsel %vm98, %v292, 0.0
  %v296 = vsel %vm143, %v290, 0
  %v299 = vsel %vm147, %v294, 0
  %301 = vmatpush.msra.mxu0 0.0
  %302 = vmatpush.msra.mxu0 0.0
  %303 = vmatpush.msra.mxu0 0.0
  %304 = vmatpush.msra.mxu0 0.0
  %305 = vmatpush.msra.mxu0 0.0
  %306 = vmatpush.msra.mxu0 0.0
  %307 = vmatpush.msra.mxu0 0.0
  %308 = vmatpush.msra.mxu0 0.0
  %309 = vmatpush.msra.mxu0 0.0
  %310 = vmatpush.msra.mxu0 0.0
  %311 = vmatpush.msra.mxu0 0.0
  %312 = vmatpush.msra.mxu0 0.0
  %313 = vmatpush.msra.mxu0 0.0
  %314 = vmatpush.msra.mxu0 0.0
  %315 = vmatpush.msra.mxu0 0.0
  %316 = vmatpush.msra.mxu0 %v299
  %317 = vmatmul.f32.gmra.mxu0 %v296
  %v318 = vpop.f32.mrf.mxu0
  %v319 = vadd.f32 0.0, %v318
  %320 = vdwg.mxu0
  %v321 = vadd.f32 %v287, %v319
  %v322 = vadd.f32 %v228, %v321
  %v323 = vld [vmem:[%s8] sm:$0xf]
  %325 = vset.pattern.permute.xlu0 0
  %326 = vperm.xlu0 %325, %v323
  %v327 = vpop.permute.xlu0 %326
  %v329 = vadd.f32 %v322, %v327
  %v330 = vmax.f32 %v329, 0.0
  %v331 = vmul.f32 %v330, %v132
  %v332 = vld [vmem:[%s6] sm:$0xf]
  %334 = vrot.lane.b32.xlu0 %v331, 1
  %v335 = vpop.permute.xlu0 %334
  %v337 = vsel %vm42, 0.0, %v335
  %s338 = scalar_lea.vmem %s6, 4
  %v339 = vld [vmem:[%s338] sm:$0xf]
  %v341 = vsel %vm143, %v339, 0
  %v343 = vsel %vm147, %v331, 0
  %345 = vmatpush.msra.mxu0 0.0
  %346 = vmatpush.msra.mxu0 0.0
  %347 = vmatpush.msra.mxu0 0.0
  %348 = vmatpush.msra.mxu0 0.0
  %349 = vmatpush.msra.mxu0 0.0
  %350 = vmatpush.msra.mxu0 0.0
  %351 = vmatpush.msra.mxu0 0.0
  %352 = vmatpush.msra.mxu0 0.0
  %353 = vmatpush.msra.mxu0 0.0
  %354 = vmatpush.msra.mxu0 0.0
  %355 = vmatpush.msra.mxu0 0.0
  %356 = vmatpush.msra.mxu0 0.0
  %357 = vmatpush.msra.mxu0 0.0
  %358 = vmatpush.msra.mxu0 0.0
  %359 = vmatpush.msra.mxu0 0.0
  %360 = vmatpush.msra.mxu0 %v343
  %361 = vmatmul.f32.gmra.mxu0 %v341
  %v362 = vpop.f32.mrf.mxu0
  %v363 = vadd.f32 0.0, %v362
  %364 = vdwg.mxu0
  %v366 = vsel %vm143, %v332, 0
  %v369 = vsel %vm147, %v337, 0
  %371 = vmatpush.msra.mxu0 0.0
  %372 = vmatpush.msra.mxu0 0.0
  %373 = vmatpush.msra.mxu0 0.0
  %374 = vmatpush.msra.mxu0 0.0
  %375 = vmatpush.msra.mxu0 0.0
  %376 = vmatpush.msra.mxu0 0.0
  %377 = vmatpush.msra.mxu0 0.0
  %378 = vmatpush.msra.mxu0 0.0
  %379 = vmatpush.msra.mxu0 0.0
  %380 = vmatpush.msra.mxu0 0.0
  %381 = vmatpush.msra.mxu0 0.0
  %382 = vmatpush.msra.mxu0 0.0
  %383 = vmatpush.msra.mxu0 0.0
  %384 = vmatpush.msra.mxu0 0.0
  %385 = vmatpush.msra.mxu0 0.0
  %386 = vmatpush.msra.mxu0 %v369
  %387 = vmatmul.f32.gmra.mxu0 %v366
  %v388 = vpop.f32.mrf.mxu0
  %v389 = vadd.f32 %v363, %v388
  %390 = vdwg.mxu0
  %s391 = scalar_lea.vmem %s6, 8
  %v392 = vld [vmem:[%s391] sm:$0xf]
  %393 = vrot.lane.b32.xlu0 %v331, 127
  %v394 = vpop.permute.xlu0 %393
  %v396 = vsel %vm98, %v394, 0.0
  %v398 = vsel %vm143, %v392, 0
  %v401 = vsel %vm147, %v396, 0
  %403 = vmatpush.msra.mxu0 0.0
  %404 = vmatpush.msra.mxu0 0.0
  %405 = vmatpush.msra.mxu0 0.0
  %406 = vmatpush.msra.mxu0 0.0
  %407 = vmatpush.msra.mxu0 0.0
  %408 = vmatpush.msra.mxu0 0.0
  %409 = vmatpush.msra.mxu0 0.0
  %410 = vmatpush.msra.mxu0 0.0
  %411 = vmatpush.msra.mxu0 0.0
  %412 = vmatpush.msra.mxu0 0.0
  %413 = vmatpush.msra.mxu0 0.0
  %414 = vmatpush.msra.mxu0 0.0
  %415 = vmatpush.msra.mxu0 0.0
  %416 = vmatpush.msra.mxu0 0.0
  %417 = vmatpush.msra.mxu0 0.0
  %418 = vmatpush.msra.mxu0 %v401
  %419 = vmatmul.f32.gmra.mxu0 %v398
  %v420 = vpop.f32.mrf.mxu0
  %v421 = vadd.f32 0.0, %v420
  %422 = vdwg.mxu0
  %v423 = vadd.f32 %v389, %v421
  %v424 = vld [vmem:[%s9] sm:$0xf]
  %426 = vset.pattern.permute.xlu0 0
  %427 = vperm.xlu0 %426, %v424
  %v428 = vpop.permute.xlu0 %427
  %v430 = vadd.f32 %v423, %v428
  %v431 = vmax.f32 %v430, 0.0
  %432 = vst [vmem:[%s10] sm:$0xf] %v431
  // Predicated region
  $region42: #{decoder_mini_block.1} parent=0 // pred_check
    _
  $region43: #{decoder_mini_block.1} parent=0 // pred_check_branch
    %434 = sbr.rel (0) target = $region45
  $region44: #{decoder_mini_block.1} parent=0 // pred_region
    _
  $region45: #{decoder_mini_block.1} parent=0 // pred_fallthru
    _
  // Predicated region
  $region46: #{decoder_mini_block.1} parent=0 // pred_check
    _
  $region47: #{decoder_mini_block.1} parent=0 // pred_check_branch
    %436 = sbr.rel (0) target = $region49
  $region48: #{decoder_mini_block.1} parent=0 // pred_region
    _
  $region49: #{decoder_mini_block.1} parent=0 // pred_fallthru
    _

</llo_original>
